<compile_context>
chip_gen: v7x
topology: tpu7x:2x2x1
jax: 0.10.0
libtpu: 0.0.40
codegen_flags: <defaults>
</compile_context>

<pallas_src>
import functools

import jax
import jax.numpy as jnp
from jax.experimental import pallas as pl
from jax.experimental.pallas import tpu as pltpu

OUT_PAD = 128  # lane-dense padded output width; q1 -> lane 0, q2 -> lane 1


def twin_critic_kernel(obs_ref, acs_ref, w1o_ref, w1a_ref, w23_ref, b_ref, out_ref):
    """Fused twin-critic MLP for one batch tile.

    Shapes (per tile):
      obs_ref : (TB, ob_dim)        acs_ref : (TB, ac_dim)
      w1o_ref : (ob_dim, HH)        w1a_ref : (ac_dim, HH)
      w23_ref : (2*HH, HH)          rows [0:HH]  = block-diag fused W2,
                                    rows [HH:2HH], cols [0:OUT_PAD] = fused W3
      b_ref   : (3, HH) fp32        row 0/1/2 = fused b1/b2/b3
      out_ref : (TB, OUT_PAD) fp32  q1 in lane 0, q2 in lane 1, rest zero
    """
    hh = w1o_ref.shape[1]
    n_out = out_ref.shape[1]
    cdt = w23_ref.dtype  # matmul operand dtype (fp32 or bf16)

    obs = obs_ref[...]
    acs = acs_ref[...]
    bias = b_ref[...].astype(jnp.float32)          # (3, HH), tiny

    w1o = w1o_ref[...]
    w1a = w1a_ref[...]
    w2 = w23_ref[0:hh, :]                          # aligned static view-load
    w3 = w23_ref[hh:2 * hh, 0:n_out]               # aligned static view-load

    # Layer 1: x @ W1 == obs @ W1[:ob] + acs @ W1[ob:]  (no concat needed).
    h = (jnp.dot(obs, w1o, preferred_element_type=jnp.float32)
         + jnp.dot(acs, w1a, preferred_element_type=jnp.float32)
         + bias[0])
    h = jnp.maximum(h, 0.0)

    # Layer 2: block-diagonal fused W2 keeps the two heads independent.
    h = jnp.dot(h.astype(cdt), w2, preferred_element_type=jnp.float32) + bias[1]
    h = jnp.maximum(h, 0.0)

    # Layer 3: lane-dense output; lanes >= 2 are zero by construction.
    out = (jnp.dot(h.astype(cdt), w3, preferred_element_type=jnp.float32)
           + bias[2, 0:n_out])
    out_ref[...] = out.astype(out_ref.dtype)


def make_params(key, ob_dim, ac_dim, size):
    """Per-head params mimicking PyTorch Linear default init.

    Weights stored as [in_features, out_features]; biases as [1, out_features].
    Structure matches MLPTwinCritic with n_layers=2 (3 Linear layers per head).
    """
    input_size = ob_dim + ac_dim
    dims = [(input_size, size), (size, size), (size, 1)]
    params = []
    for fan_in, fan_out in dims:
        key, kw, kb = jax.random.split(key, 3)
        bound = 1.0 / jnp.sqrt(fan_in)
        w = jax.random.uniform(kw, (fan_in, fan_out), jnp.float32, -bound, bound)
        b = jax.random.uniform(kb, (1, fan_out), jnp.float32, -bound, bound)
        params += [w, b]
    return key, tuple(params)


def pack_twin_params(params_a, params_b, ob_dim, ac_dim, size,
                     operand_dtype=jnp.float32):
    """Fuse the two heads into padded, contiguous slabs for the kernel."""
    w1a_, b1a_, w2a_, b2a_, w3a_, b3a_ = params_a
    w1b_, b1b_, w2b_, b2b_, w3b_, b3b_ = params_b
    h = size
    h_pad = max(128, ((h + 127) // 128) * 128)
    hh = 2 * h_pad

    # Fused W1: heads side by side along lanes; split by obs/acs rows.
    w1f = jnp.zeros((ob_dim + ac_dim, hh), jnp.float32)
    w1f = w1f.at[:, 0:h].set(w1a_).at[:, h_pad:h_pad + h].set(w1b_)
    w1_obs = w1f[:ob_dim]
    w1_acs = w1f[ob_dim:]

    # Fused W2: block-diagonal (off-diagonal zeros keep the heads independent).
    w2f = jnp.zeros((hh, hh), jnp.float32)
    w2f = (w2f.at[0:h, 0:h].set(w2a_)
               .at[h_pad:h_pad + h, h_pad:h_pad + h].set(w2b_))

    # Fused W3: q1 in column 0, q2 in column 1, rest zero.
    w3f = jnp.zeros((hh, OUT_PAD), jnp.float32)
    w3f = (w3f.at[0:h, 0:1].set(w3a_)
               .at[h_pad:h_pad + h, 1:2].set(w3b_))

    # One contiguous W2+W3 slab.
    w23 = jnp.zeros((2 * hh, hh), jnp.float32)
    w23 = w23.at[0:hh, :].set(w2f).at[hh:, 0:OUT_PAD].set(w3f)

    # One bias slab (fp32 always).
    bias = jnp.zeros((3, hh), jnp.float32)
    bias = bias.at[0, 0:h].set(b1a_[0]).at[0, h_pad:h_pad + h].set(b1b_[0])
    bias = bias.at[1, 0:h].set(b2a_[0]).at[1, h_pad:h_pad + h].set(b2b_[0])
    bias = bias.at[2, 0].set(b3a_[0, 0]).at[2, 1].set(b3b_[0, 0])

    return (w1_obs.astype(operand_dtype), w1_acs.astype(operand_dtype),
            w23.astype(operand_dtype), bias)


@functools.partial(jax.jit, static_argnames=("tile_b", "operand_dtype"))
def twin_critic_forward(obs, acs, packed, *, tile_b=512,
                        operand_dtype=jnp.float32):
    """Forward pass: returns (q1, q2) each of shape (B, 1), fp32."""
    w1_obs, w1_acs, w23, bias = packed
    B, ob_dim = obs.shape
    ac_dim = acs.shape[1]

    obs = obs.astype(operand_dtype)
    acs = acs.astype(operand_dtype)

    # Batch tiling: largest tile up to tile_b (multiple of 8); pad ragged batch.
    b_pad = max(8, ((B + 7) // 8) * 8)
    tb = min(tile_b, b_pad)
    b_grid = ((b_pad + tb - 1) // tb) * tb
    if b_grid != B:
        obs = jnp.pad(obs, ((0, b_grid - B), (0, 0)))
        acs = jnp.pad(acs, ((0, b_grid - B), (0, 0)))
    grid = (b_grid // tb,)

    in_specs = [
        pl.BlockSpec((tb, ob_dim), lambda i: (i, 0)),
        pl.BlockSpec((tb, ac_dim), lambda i: (i, 0)),
        # Weight / bias slabs: constant index_map -> VMEM-resident across tiles.
        pl.BlockSpec(w1_obs.shape, lambda i: (0, 0)),
        pl.BlockSpec(w1_acs.shape, lambda i: (0, 0)),
        pl.BlockSpec(w23.shape, lambda i: (0, 0)),
        pl.BlockSpec(bias.shape, lambda i: (0, 0)),
    ]
    out_specs = pl.BlockSpec((tb, OUT_PAD), lambda i: (i, 0))

    out = pl.pallas_call(
        twin_critic_kernel,
        grid=grid,
        in_specs=in_specs,
        out_specs=out_specs,
        out_shape=jax.ShapeDtypeStruct((b_grid, OUT_PAD), jnp.float32),
        # Batch tiles are independent -> shard across TensorCores (v7x: 2 TCs).
        # VMEM default scoped limit is ample for these slab/tile sizes, so we do
        # not override vmem_limit_bytes here.
        compiler_params=pltpu.CompilerParams(
            dimension_semantics=("parallel",)),
    )(obs, acs, w1_obs, w1_acs, w23, bias)

    q1 = out[:B, 0:1]
    q2 = out[:B, 1:2]
    return q1, q2


def reference_forward(obs, acs, params_a, params_b):
    x = jnp.concatenate([obs, acs], axis=-1).astype(jnp.float32)

    def mlp(p):
        w1, b1, w2, b2, w3, b3 = p
        h = jnp.maximum(x @ w1 + b1, 0.0)
        h = jnp.maximum(h @ w2 + b2, 0.0)
        return h @ w3 + b3

    return mlp(params_a), mlp(params_b)


if __name__ == "__main__":
    # Small shapes consistent with the module: (ob_dim + ac_dim) -> hidden -> hidden -> 1
    B, OB_DIM, AC_DIM, SIZE = 8, 12, 4, 32

    key = jax.random.PRNGKey(0)
    key, params_q1 = make_params(key, OB_DIM, AC_DIM, SIZE)
    key, params_q2 = make_params(key, OB_DIM, AC_DIM, SIZE)

    key, k_obs, k_acs = jax.random.split(key, 3)
    obs = jax.random.normal(k_obs, (B, OB_DIM), jnp.float32)
    acs = jax.random.normal(k_acs, (B, AC_DIM), jnp.float32)

    # On v6e / v7x pass operand_dtype=jnp.bfloat16 for full-rate MXU; fp32
    # default keeps bit-level parity with the reference and suits v5e.
    packed = pack_twin_params(params_q1, params_q2, OB_DIM, AC_DIM, SIZE)

    q1, q2 = twin_critic_forward(obs, acs, packed)
    jax.block_until_ready((q1, q2))

    q1_ref, q2_ref = reference_forward(obs, acs, params_q1, params_q2)
    assert q1.shape == (B, 1) and q2.shape == (B, 1)
    assert jnp.allclose(q1, q1_ref, atol=1e-4, rtol=1e-4)
    assert jnp.allclose(q2, q2_ref, atol=1e-4, rtol=1e-4)

    # Exercise the multi-tile grid + ragged-batch path (grid=(3,), padded 20->24).
    B2 = 20
    key, k_obs2, k_acs2 = jax.random.split(key, 3)
    obs2 = jax.random.normal(k_obs2, (B2, OB_DIM), jnp.float32)
    acs2 = jax.random.normal(k_acs2, (B2, AC_DIM), jnp.float32)
    q1b, q2b = twin_critic_forward(obs2, acs2, packed, tile_b=8)
    jax.block_until_ready((q1b, q2b))
    q1b_ref, q2b_ref = reference_forward(obs2, acs2, params_q1, params_q2)
    assert q1b.shape == (B2, 1) and q2b.shape == (B2, 1)
    assert jnp.allclose(q1b, q1b_ref, atol=1e-4, rtol=1e-4)
    assert jnp.allclose(q2b, q2b_ref, atol=1e-4, rtol=1e-4)

    # TODO(synk): optimizer (Adam), save/load are training/IO-side and are not
    # part of the kernel forward pass.
    print("KERNEL_OK")
</pallas_src>

<mosaic_0001>
module attributes {stable_mosaic.version = 11 : i64} {
  func.func @twin_critic_kernel(%arg0: i32, %arg1: memref<8x12xf32, #tpu.memory_space<vmem>>, %arg2: memref<8x4xf32, #tpu.memory_space<vmem>>, %arg3: memref<12x256xf32, #tpu.memory_space<vmem>>, %arg4: memref<4x256xf32, #tpu.memory_space<vmem>>, %arg5: memref<512x256xf32, #tpu.memory_space<vmem>>, %arg6: memref<3x256xf32, #tpu.memory_space<vmem>>, %arg7: memref<8x128xf32, #tpu.memory_space<vmem>>) attributes {dimension_semantics = [#tpu.dimension_semantics<parallel>], iteration_bounds = array<i64: 1>, scalar_prefetch = 0 : i64, scratch_operands = 0 : i64, tpu.core_type = #tpu.core_type<tc>, window_params = [{transform_indices = @transform_0, window_bounds = array<i64: 8, 12>}, {transform_indices = @transform_1, window_bounds = array<i64: 8, 4>}, {pipeline_mode = #tpu.pipeline_mode<synchronous>, transform_indices = @transform_2, window_bounds = array<i64: 12, 256>}, {pipeline_mode = #tpu.pipeline_mode<synchronous>, transform_indices = @transform_3, window_bounds = array<i64: 4, 256>}, {pipeline_mode = #tpu.pipeline_mode<synchronous>, transform_indices = @transform_4, window_bounds = array<i64: 512, 256>}, {pipeline_mode = #tpu.pipeline_mode<synchronous>, transform_indices = @transform_5, window_bounds = array<i64: 3, 256>}, {transform_indices = @transform_6, window_bounds = array<i64: 8, 128>}]} {
    %c0 = arith.constant 0 : index
    %c0_0 = arith.constant 0 : index
    %0 = vector.load %arg1[%c0, %c0_0] : memref<8x12xf32, #tpu.memory_space<vmem>>, vector<8x12xf32>
    %c0_1 = arith.constant 0 : index
    %c0_2 = arith.constant 0 : index
    %1 = vector.load %arg2[%c0_1, %c0_2] : memref<8x4xf32, #tpu.memory_space<vmem>>, vector<8x4xf32>
    %c0_3 = arith.constant 0 : index
    %c0_4 = arith.constant 0 : index
    %2 = vector.load %arg6[%c0_3, %c0_4] : memref<3x256xf32, #tpu.memory_space<vmem>>, vector<3x256xf32>
    %c0_5 = arith.constant 0 : index
    %c0_6 = arith.constant 0 : index
    %3 = vector.load %arg3[%c0_5, %c0_6] : memref<12x256xf32, #tpu.memory_space<vmem>>, vector<12x256xf32>
    %c0_7 = arith.constant 0 : index
    %c0_8 = arith.constant 0 : index
    %4 = vector.load %arg4[%c0_7, %c0_8] : memref<4x256xf32, #tpu.memory_space<vmem>>, vector<4x256xf32>
    %c0_9 = arith.constant 0 : index
    %c0_10 = arith.constant 0 : index
    %5 = vector.load %arg5[%c0_9, %c0_10] : memref<512x256xf32, #tpu.memory_space<vmem>>, vector<256x256xf32>
    %c256 = arith.constant 256 : index
    %c0_11 = arith.constant 0 : index
    %6 = vector.load %arg5[%c256, %c0_11] : memref<512x256xf32, #tpu.memory_space<vmem>>, vector<256x128xf32>
    %cst = arith.constant dense<0.000000e+00> : vector<8x256xf32>
    %7 = tpu.matmul %0, %3, %cst {dimension_numbers = #tpu.dot_dimension_numbers<[1], [0], [0], [1], [0, 0, 1, 1], [], []>} : vector<8x12xf32>, vector<12x256xf32>, vector<8x256xf32> -> vector<8x256xf32>
    %cst_12 = arith.constant dense<0.000000e+00> : vector<8x256xf32>
    %8 = tpu.matmul %1, %4, %cst_12 {dimension_numbers = #tpu.dot_dimension_numbers<[1], [0], [0], [1], [0, 0, 1, 1], [], []>} : vector<8x4xf32>, vector<4x256xf32>, vector<8x256xf32> -> vector<8x256xf32>
    %9 = arith.addf %7, %8 : vector<8x256xf32>
    %10 = vector.extract_strided_slice %2 {offsets = [0, 0], sizes = [1, 256], strides = [1, 1]} : vector<3x256xf32> to vector<1x256xf32>
    %11 = vector.shape_cast %10 : vector<1x256xf32> to vector<256xf32>
    %12 = vector.shape_cast %11 : vector<256xf32> to vector<1x256xf32>
    %13 = vector.broadcast %12 : vector<1x256xf32> to vector<8x256xf32>
    %14 = arith.addf %9, %13 : vector<8x256xf32>
    %cst_13 = arith.constant 0.000000e+00 : f32
    %15 = vector.broadcast %cst_13 : f32 to vector<8x256xf32>
    %16 = arith.maximumf %14, %15 : vector<8x256xf32>
    %cst_14 = arith.constant dense<0.000000e+00> : vector<8x256xf32>
    %17 = tpu.matmul %16, %5, %cst_14 {dimension_numbers = #tpu.dot_dimension_numbers<[1], [0], [0], [1], [0, 0, 1, 1], [], []>} : vector<8x256xf32>, vector<256x256xf32>, vector<8x256xf32> -> vector<8x256xf32>
    %18 = vector.extract_strided_slice %2 {offsets = [1, 0], sizes = [1, 256], strides = [1, 1]} : vector<3x256xf32> to vector<1x256xf32>
    %19 = vector.shape_cast %18 : vector<1x256xf32> to vector<256xf32>
    %20 = vector.shape_cast %19 : vector<256xf32> to vector<1x256xf32>
    %21 = vector.broadcast %20 : vector<1x256xf32> to vector<8x256xf32>
    %22 = arith.addf %17, %21 : vector<8x256xf32>
    %cst_15 = arith.constant 0.000000e+00 : f32
    %23 = vector.broadcast %cst_15 : f32 to vector<8x256xf32>
    %24 = arith.maximumf %22, %23 : vector<8x256xf32>
    %cst_16 = arith.constant dense<0.000000e+00> : vector<8x128xf32>
    %25 = tpu.matmul %24, %6, %cst_16 {dimension_numbers = #tpu.dot_dimension_numbers<[1], [0], [0], [1], [0, 0, 1, 1], [], []>} : vector<8x256xf32>, vector<256x128xf32>, vector<8x128xf32> -> vector<8x128xf32>
    %26 = vector.extract_strided_slice %2 {offsets = [2, 0], sizes = [1, 128], strides = [1, 1]} : vector<3x256xf32> to vector<1x128xf32>
    %27 = vector.shape_cast %26 : vector<1x128xf32> to vector<128xf32>
    %28 = vector.shape_cast %27 : vector<128xf32> to vector<1x128xf32>
    %29 = vector.broadcast %28 : vector<1x128xf32> to vector<8x128xf32>
    %30 = arith.addf %25, %29 : vector<8x128xf32>
    %c0_17 = arith.constant 0 : index
    %c0_18 = arith.constant 0 : index
    %31 = vector.load %arg7[%c0_17, %c0_18] : memref<8x128xf32, #tpu.memory_space<vmem>>, vector<8x128xf32>
    tpu.vector_store %arg7[%c0_17, %c0_18], %30 {strides = array<i32>} : memref<8x128xf32, #tpu.memory_space<vmem>>, vector<8x128xf32>,
    return
  }
  func.func @transform_0(%arg0: i32) -> (i32, i32) {
    %c0_i32 = arith.constant 0 : i32
    %c0_i32_0 = arith.constant 0 : i32
    return %arg0, %c0_i32 : i32, i32
  }
  func.func @transform_1(%arg0: i32) -> (i32, i32) {
    %c0_i32 = arith.constant 0 : i32
    %c0_i32_0 = arith.constant 0 : i32
    return %arg0, %c0_i32 : i32, i32
  }
  func.func @transform_2(%arg0: i32) -> (i32, i32) {
    %c0_i32 = arith.constant 0 : i32
    %c0_i32_0 = arith.constant 0 : i32
    %c0_i32_1 = arith.constant 0 : i32
    return %c0_i32, %c0_i32_0 : i32, i32
  }
  func.func @transform_3(%arg0: i32) -> (i32, i32) {
    %c0_i32 = arith.constant 0 : i32
    %c0_i32_0 = arith.constant 0 : i32
    %c0_i32_1 = arith.constant 0 : i32
    return %c0_i32, %c0_i32_0 : i32, i32
  }
  func.func @transform_4(%arg0: i32) -> (i32, i32) {
    %c0_i32 = arith.constant 0 : i32
    %c0_i32_0 = arith.constant 0 : i32
    %c0_i32_1 = arith.constant 0 : i32
    return %c0_i32, %c0_i32_0 : i32, i32
  }
  func.func @transform_5(%arg0: i32) -> (i32, i32) {
    %c0_i32 = arith.constant 0 : i32
    %c0_i32_0 = arith.constant 0 : i32
    %c0_i32_1 = arith.constant 0 : i32
    return %c0_i32, %c0_i32_0 : i32, i32
  }
  func.func @transform_6(%arg0: i32) -> (i32, i32) {
    %c0_i32 = arith.constant 0 : i32
    %c0_i32_0 = arith.constant 0 : i32
    return %arg0, %c0_i32 : i32, i32
  }
}

</mosaic_0001>

<llo_original>
// kernel: twin_critic_forward.1
$region0: #{twin_critic_forward.1}
  #allocation0 [shape = 'u32[]', space=smem, size = 0x4, offset = 0x4, fixed_abs, tag = 'smem constant byte address 0x4 - core index']
  #allocation1 [shape = 'u32[144,128]{1,0:T(1,128)}', space=vmem, size = 0x12000, scoped, tag = 'internal scratch']
  %s0 = inlined_call_operand.vmem [shape: f32[8,12], index: 0, kind: input, shape index: {}]
  %s1 = inlined_call_operand.vmem [shape: f32[8,4], index: 1, kind: input, shape index: {}]
  %s2 = inlined_call_operand.hbm [shape: f32[12,256], index: 2, kind: input, shape index: {}]
  %s3 = inlined_call_operand.vmem [shape: f32[4,256], index: 3, kind: input, shape index: {}]
  %s4 = inlined_call_operand.hbm [shape: f32[512,256], index: 4, kind: input, shape index: {}]
  %s5 = inlined_call_operand.vmem [shape: f32[3,256], index: 5, kind: input, shape index: {}]
  %s6 = inlined_call_operand.vmem [shape: f32[8,128], index: 6, kind: output, shape index: {}]
  %s7 = sld [smem:[#allocation0]]
  $region42: #{twin_critic_forward.1} parent=0
    _
  %s9 = ssub.s32 1, %s7
  %s10 = scalar_select 0, %s9, %s7
  $region1: #{twin_critic_forward.1} parent=0
    #allocation2 [shape = 'u8[16384]{0}', space=vmem, size = 0x4000, scoped, tag = 'input window, operand 2, single buffered']
    #allocation3 [shape = 's32[1]{0}', space=sflag, size = 0x4, scoped, tag = 'scoped memory for twin_critic_forward.1']
    #allocation4 [shape = 'u8[524288]{0}', space=vmem, size = 0x80000, scoped, tag = 'input window, operand 4, single buffered']
    #allocation5 [shape = 's32[1]{0}', space=sflag, size = 0x4, scoped, tag = 'scoped memory for twin_critic_forward.1']
    %11 = vsyncpa [#allocation3], 0
    %12 = vsyncpa [#allocation5], 0
    // Predicated region
    $region2: #{twin_critic_forward.1} parent=1 // pred_check
      _
    $region3: #{twin_critic_forward.1} parent=1 // pred_check_branch
      %14 = sbr.rel (0) target = $region5
    $region4: #{twin_critic_forward.1} parent=1 // pred_region
      _
    $region5: #{twin_critic_forward.1} parent=1 // pred_fallthru
      _
    // Predicated region
    $region6: #{twin_critic_forward.1} parent=1 // pred_check
      _
    $region7: #{twin_critic_forward.1} parent=1 // pred_check_branch
      %16 = sbr.rel (0) target = $region9
    $region8: #{twin_critic_forward.1} parent=1 // pred_region
      _
    $region9: #{twin_critic_forward.1} parent=1 // pred_fallthru
      _
    // Predicated region
    $region10: #{twin_critic_forward.1} parent=1 // pred_check
      _
    $region11: #{twin_critic_forward.1} parent=1 // pred_check_branch
      %18 = sbr.rel (0) target = $region13
    $region12: #{twin_critic_forward.1} parent=1 // pred_region
      %s20 = ssub.s32 512, 512
      %21 = vsyncadd [#allocation3], %s20
      %s22 = sshll.u32 [#allocation2], 4
      %s23 = int_to_ptr.vmem [resolvable:$true] %s22
      %28 = dma.hbm_to_vmem [thread:$0]  %s2, 512, %s23, [#allocation3], 256, 256, 16
    $region13: #{twin_critic_forward.1} parent=1 // pred_fallthru
      _
    // Predicated region
    $region14: #{twin_critic_forward.1} parent=1 // pred_check
      _
    $region15: #{twin_critic_forward.1} parent=1 // pred_check_branch
      %30 = sbr.rel (0) target = $region17
    $region16: #{twin_critic_forward.1} parent=1 // pred_region
      _
    $region17: #{twin_critic_forward.1} parent=1 // pred_fallthru
      _
    // Predicated region
    $region18: #{twin_critic_forward.1} parent=1 // pred_check
      _
    $region19: #{twin_critic_forward.1} parent=1 // pred_check_branch
      %32 = sbr.rel (0) target = $region21
    $region20: #{twin_critic_forward.1} parent=1 // pred_region
      %s34 = ssub.s32 16384, 16384
      %35 = vsyncadd [#allocation5], %s34
      %s36 = sshll.u32 [#allocation4], 4
      %s37 = int_to_ptr.vmem [resolvable:$true] %s36
      %42 = dma.hbm_to_vmem [thread:$0]  %s4, 16384, %s37, [#allocation5], 256, 256, 16
    $region21: #{twin_critic_forward.1} parent=1 // pred_fallthru
      _
    // Predicated region
    $region22: #{twin_critic_forward.1} parent=1 // pred_check
      _
    $region23: #{twin_critic_forward.1} parent=1 // pred_check_branch
      %44 = sbr.rel (0) target = $region25
    $region24: #{twin_critic_forward.1} parent=1 // pred_region
      _
    $region25: #{twin_critic_forward.1} parent=1 // pred_fallthru
      _
    // Predicated region
    $region26: #{twin_critic_forward.1} parent=1 // pred_check
      _
    $region27: #{twin_critic_forward.1} parent=1 // pred_check_branch
      %46 = sbr.rel (0) target = $region29
    $region28: #{twin_critic_forward.1} parent=1 // pred_region
      %47 = dma.done [#allocation3], 512
    $region29: #{twin_critic_forward.1} parent=1 // pred_fallthru
      _
    // Predicated region
    $region30: #{twin_critic_forward.1} parent=1 // pred_check
      _
    $region31: #{twin_critic_forward.1} parent=1 // pred_check_branch
      %49 = sbr.rel (0) target = $region33
    $region32: #{twin_critic_forward.1} parent=1 // pred_region
      %50 = dma.done [#allocation5], 16384
    $region33: #{twin_critic_forward.1} parent=1 // pred_fallthru
      _
    %v51 = vld [vmem:[%s0] sm:$0xff]
    %v52 = vld [vmem:[%s1] sm:$0xff]
    %v53 = vld [vmem:[%s5] sm:$0x77]
    %v54 = vld [vmem:[#allocation2] sm:$0xff]
    %v55 = vld [vmem:[#allocation2 + $0x8] sm:$0xff]
    %v56 = vld [vmem:[#allocation2 + $0x10] sm:$0xf]
    %v57 = vld [vmem:[#allocation2 + $0x18] sm:$0xf]
    %v58 = vld [vmem:[%s3] sm:$0xff]
    %v59 = vld [vmem:[#allocation4] sm:$0xff]
    %v60 = vld [vmem:[#allocation4 + $0x8] sm:$0xff]
    %v61 = vld [vmem:[#allocation4 + $0x10] sm:$0xff]
    %v62 = vld [vmem:[#allocation4 + $0x18] sm:$0xff]
    %v63 = vld [vmem:[#allocation4 + $0x20] sm:$0xff]
    %v64 = vld [vmem:[#allocation4 + $0x28] sm:$0xff]
    %v65 = vld [vmem:[#allocation4 + $0x30] sm:$0xff]
    %v66 = vld [vmem:[#allocation4 + $0x38] sm:$0xff]
    %v67 = vld [vmem:[#allocation4 + $0x40] sm:$0xff]
    %v68 = vld [vmem:[#allocation4 + $0x48] sm:$0xff]
    %v69 = vld [vmem:[#allocation4 + $0x50] sm:$0xff]
    %v70 = vld [vmem:[#allocation4 + $0x58] sm:$0xff]
    %v71 = vld [vmem:[#allocation4 + $0x60] sm:$0xff]
    %v72 = vld [vmem:[#allocation4 + $0x68] sm:$0xff]
    %v73 = vld [vmem:[#allocation4 + $0x70] sm:$0xff]
    %v74 = vld [vmem:[#allocation4 + $0x78] sm:$0xff]
    %v75 = vld [vmem:[#allocation4 + $0x80] sm:$0xff]
    %v76 = vld [vmem:[#allocation4 + $0x88] sm:$0xff]
    %v77 = vld [vmem:[#allocation4 + $0x90] sm:$0xff]
    %v78 = vld [vmem:[#allocation4 + $0x98] sm:$0xff]
    %v79 = vld [vmem:[#allocation4 + $0xa0] sm:$0xff]
    %v80 = vld [vmem:[#allocation4 + $0xa8] sm:$0xff]
    %v81 = vld [vmem:[#allocation4 + $0xb0] sm:$0xff]
    %v82 = vld [vmem:[#allocation4 + $0xb8] sm:$0xff]
    %v83 = vld [vmem:[#allocation4 + $0xc0] sm:$0xff]
    %v84 = vld [vmem:[#allocation4 + $0xc8] sm:$0xff]
    %v85 = vld [vmem:[#allocation4 + $0xd0] sm:$0xff]
    %v86 = vld [vmem:[#allocation4 + $0xd8] sm:$0xff]
    %v87 = vld [vmem:[#allocation4 + $0xe0] sm:$0xff]
    %v88 = vld [vmem:[#allocation4 + $0xe8] sm:$0xff]
    %v89 = vld [vmem:[#allocation4 + $0xf0] sm:$0xff]
    %v90 = vld [vmem:[#allocation4 + $0xf8] sm:$0xff]
    %v91 = vld [vmem:[#allocation4 + $0x100] sm:$0xff]
    %v92 = vld [vmem:[#allocation4 + $0x108] sm:$0xff]
    %v93 = vld [vmem:[#allocation4 + $0x110] sm:$0xff]
    %v94 = vld [vmem:[#allocation4 + $0x118] sm:$0xff]
    %v95 = vld [vmem:[#allocation4 + $0x120] sm:$0xff]
    %v96 = vld [vmem:[#allocation4 + $0x128] sm:$0xff]
    %v97 = vld [vmem:[#allocation4 + $0x130] sm:$0xff]
    %v98 = vld [vmem:[#allocation4 + $0x138] sm:$0xff]
    %v99 = vld [vmem:[#allocation4 + $0x140] sm:$0xff]
    %v100 = vld [vmem:[#allocation4 + $0x148] sm:$0xff]
    %v101 = vld [vmem:[#allocation4 + $0x150] sm:$0xff]
    %v102 = vld [vmem:[#allocation4 + $0x158] sm:$0xff]
    %v103 = vld [vmem:[#allocation4 + $0x160] sm:$0xff]
    %v104 = vld [vmem:[#allocation4 + $0x168] sm:$0xff]
    %v105 = vld [vmem:[#allocation4 + $0x170] sm:$0xff]
    %v106 = vld [vmem:[#allocation4 + $0x178] sm:$0xff]
    %v107 = vld [vmem:[#allocation4 + $0x180] sm:$0xff]
    %v108 = vld [vmem:[#allocation4 + $0x188] sm:$0xff]
    %v109 = vld [vmem:[#allocation4 + $0x190] sm:$0xff]
    %v110 = vld [vmem:[#allocation4 + $0x198] sm:$0xff]
    %v111 = vld [vmem:[#allocation4 + $0x1a0] sm:$0xff]
    %v112 = vld [vmem:[#allocation4 + $0x1a8] sm:$0xff]
    %v113 = vld [vmem:[#allocation4 + $0x1b0] sm:$0xff]
    %v114 = vld [vmem:[#allocation4 + $0x1b8] sm:$0xff]
    %v115 = vld [vmem:[#allocation4 + $0x1c0] sm:$0xff]
    %v116 = vld [vmem:[#allocation4 + $0x1c8] sm:$0xff]
    %v117 = vld [vmem:[#allocation4 + $0x1d0] sm:$0xff]
    %v118 = vld [vmem:[#allocation4 + $0x1d8] sm:$0xff]
    %v119 = vld [vmem:[#allocation4 + $0x1e0] sm:$0xff]
    %v120 = vld [vmem:[#allocation4 + $0x1e8] sm:$0xff]
    %v121 = vld [vmem:[#allocation4 + $0x1f0] sm:$0xff]
    %v122 = vld [vmem:[#allocation4 + $0x1f8] sm:$0xff]
    %v123 = vld [vmem:[#allocation4 + $0x200] sm:$0xff]
    %v124 = vld [vmem:[#allocation4 + $0x210] sm:$0xff]
    %v125 = vld [vmem:[#allocation4 + $0x220] sm:$0xff]
    %v126 = vld [vmem:[#allocation4 + $0x230] sm:$0xff]
    %v127 = vld [vmem:[#allocation4 + $0x240] sm:$0xff]
    %v128 = vld [vmem:[#allocation4 + $0x250] sm:$0xff]
    %v129 = vld [vmem:[#allocation4 + $0x260] sm:$0xff]
    %v130 = vld [vmem:[#allocation4 + $0x270] sm:$0xff]
    %v131 = vld [vmem:[#allocation4 + $0x280] sm:$0xff]
    %v132 = vld [vmem:[#allocation4 + $0x290] sm:$0xff]
    %v133 = vld [vmem:[#allocation4 + $0x2a0] sm:$0xff]
    %v134 = vld [vmem:[#allocation4 + $0x2b0] sm:$0xff]
    %v135 = vld [vmem:[#allocation4 + $0x2c0] sm:$0xff]
    %v136 = vld [vmem:[#allocation4 + $0x2d0] sm:$0xff]
    %v137 = vld [vmem:[#allocation4 + $0x2e0] sm:$0xff]
    %v138 = vld [vmem:[#allocation4 + $0x2f0] sm:$0xff]
    %v139 = vld [vmem:[#allocation4 + $0x300] sm:$0xff]
    %v140 = vld [vmem:[#allocation4 + $0x310] sm:$0xff]
    %v141 = vld [vmem:[#allocation4 + $0x320] sm:$0xff]
    %v142 = vld [vmem:[#allocation4 + $0x330] sm:$0xff]
    %v143 = vld [vmem:[#allocation4 + $0x340] sm:$0xff]
    %v144 = vld [vmem:[#allocation4 + $0x350] sm:$0xff]
    %v145 = vld [vmem:[#allocation4 + $0x360] sm:$0xff]
    %v146 = vld [vmem:[#allocation4 + $0x370] sm:$0xff]
    %v147 = vld [vmem:[#allocation4 + $0x380] sm:$0xff]
    %v148 = vld [vmem:[#allocation4 + $0x390] sm:$0xff]
    %v149 = vld [vmem:[#allocation4 + $0x3a0] sm:$0xff]
    %v150 = vld [vmem:[#allocation4 + $0x3b0] sm:$0xff]
    %v151 = vld [vmem:[#allocation4 + $0x3c0] sm:$0xff]
    %v152 = vld [vmem:[#allocation4 + $0x3d0] sm:$0xff]
    %v153 = vld [vmem:[#allocation4 + $0x3e0] sm:$0xff]
    %v154 = vld [vmem:[#allocation4 + $0x3f0] sm:$0xff]
    %v156 = vcombine.high %v58, %v58
    %vm157 = vcmask 31744
    %v159 = vsel %vm157, %v52, 0
    %vm161 = vcmask 1043456
    %v162 = vsel %vm161, %v58, 0
    %v164 = vsel %vm161, %v156, 0
    %166 = vmatprep.subr.mxu0 %v164
    %167 = vmatpush1.msra.mxu0 %v162
    %168 = vmatprep.subr.mxu0 0.0
    %169 = vmatpush1.msra.mxu0 0.0
    %170 = vmatprep.subr.mxu0 0.0
    %171 = vmatpush1.msra.mxu0 0.0
    %172 = vmatprep.subr.mxu0 0.0
    %173 = vmatpush1.msra.mxu0 0.0
    %174 = vmatprep.subr.mxu0 0.0
    %175 = vmatpush1.msra.mxu0 0.0
    %176 = vmatprep.subr.mxu0 0.0
    %177 = vmatpush1.msra.mxu0 0.0
    %178 = vmatprep.subr.mxu0 0.0
    %179 = vmatpush1.msra.mxu0 0.0
    %180 = vmatprep.subr.mxu0 0.0
    %181 = vmatpush1.msra.mxu0 0.0
    %182 = vmatprep.subr.mxu0 0.0
    %183 = vmatpush1.msra.mxu0 0.0
    %184 = vmatprep.subr.mxu0 0.0
    %185 = vmatpush1.msra.mxu0 0.0
    %186 = vmatprep.subr.mxu0 0.0
    %187 = vmatpush1.msra.mxu0 0.0
    %188 = vmatprep.subr.mxu0 0.0
    %189 = vmatpush1.msra.mxu0 0.0
    %190 = vmatprep.subr.mxu0 0.0
    %191 = vmatpush1.msra.mxu0 0.0
    %192 = vmatprep.subr.mxu0 0.0
    %193 = vmatpush1.msra.mxu0 0.0
    %194 = vmatprep.subr.mxu0 0.0
    %195 = vmatpush1.msra.mxu0 0.0
    %196 = vmatprep.subr.mxu0 0.0
    %197 = vmatpush1.msra.mxu0 0.0
    %198 = vmatprep.subr.mxu0 0.0
    %199 = vmatpush1.msra.mxu0 0.0
    %200 = vmatprep.subr.mxu0 0.0
    %201 = vmatpush1.msra.mxu0 0.0
    %202 = vmatprep.subr.mxu0 0.0
    %203 = vmatpush1.msra.mxu0 0.0
    %204 = vmatprep.subr.mxu0 0.0
    %205 = vmatpush1.msra.mxu0 0.0
    %206 = vmatprep.subr.mxu0 0.0
    %207 = vmatpush1.msra.mxu0 0.0
    %208 = vmatprep.subr.mxu0 0.0
    %209 = vmatpush1.msra.mxu0 0.0
    %210 = vmatprep.subr.mxu0 0.0
    %211 = vmatpush1.msra.mxu0 0.0
    %212 = vmatprep.subr.mxu0 0.0
    %213 = vmatpush1.msra.mxu0 0.0
    %214 = vmatprep.subr.mxu0 0.0
    %215 = vmatpush1.msra.mxu0 0.0
    %216 = vmatprep.subr.mxu0 0.0
    %217 = vmatpush1.msra.mxu0 0.0
    %218 = vmatprep.subr.mxu0 0.0
    %219 = vmatpush1.msra.mxu0 0.0
    %220 = vmatprep.subr.mxu0 0.0
    %221 = vmatpush1.msra.mxu0 0.0
    %222 = vmatprep.subr.mxu0 0.0
    %223 = vmatpush1.msra.mxu0 0.0
    %224 = vmatprep.subr.mxu0 0.0
    %225 = vmatpush1.msra.mxu0 0.0
    %226 = vmatprep.subr.mxu0 0.0
    %227 = vmatpush1.msra.mxu0 0.0
    %228 = vmatprep.subr.mxu0 0.0
    %229 = vmatpush1.msra.mxu0 0.0
    %230 = vmatprep.mubr.f32.mxu0 0.0
    %231 = vmatmul.mubr.f32.gmra.mrb[0].mxu0 %v159
    %v232 = vpop.f32.mrb[0].mxu0
    %v233 = vadd.f32 0.0, %v232
    %v234 = vpop.f32.mrb[0].mxu0
    %v235 = vadd.f32 0.0, %v234
    %236 = vdwg.mxu0
    %vm237 = vcmask 97280
    %v239 = vsel %vm237, %v51, 0
    %v242 = vsel %vm161, %v56, 0
    %v245 = vsel %vm161, %v57, 0
    %247 = vmatprep.subr.mxu0 %v55
    %248 = vmatpush1.msra.mxu0 %v54
    %249 = vmatprep.subr.mxu0 %v245
    %250 = vmatpush1.msra.mxu0 %v242
    %251 = vmatprep.subr.mxu0 0.0
    %252 = vmatpush1.msra.mxu0 0.0
    %253 = vmatprep.subr.mxu0 0.0
    %254 = vmatpush1.msra.mxu0 0.0
    %255 = vmatprep.subr.mxu0 0.0
    %256 = vmatpush1.msra.mxu0 0.0
    %257 = vmatprep.subr.mxu0 0.0
    %258 = vmatpush1.msra.mxu0 0.0
    %259 = vmatprep.subr.mxu0 0.0
    %260 = vmatpush1.msra.mxu0 0.0
    %261 = vmatprep.subr.mxu0 0.0
    %262 = vmatpush1.msra.mxu0 0.0
    %263 = vmatprep.subr.mxu0 0.0
    %264 = vmatpush1.msra.mxu0 0.0
    %265 = vmatprep.subr.mxu0 0.0
    %266 = vmatpush1.msra.mxu0 0.0
    %267 = vmatprep.subr.mxu0 0.0
    %268 = vmatpush1.msra.mxu0 0.0
    %269 = vmatprep.subr.mxu0 0.0
    %270 = vmatpush1.msra.mxu0 0.0
    %271 = vmatprep.subr.mxu0 0.0
    %272 = vmatpush1.msra.mxu0 0.0
    %273 = vmatprep.subr.mxu0 0.0
    %274 = vmatpush1.msra.mxu0 0.0
    %275 = vmatprep.subr.mxu0 0.0
    %276 = vmatpush1.msra.mxu0 0.0
    %277 = vmatprep.subr.mxu0 0.0
    %278 = vmatpush1.msra.mxu0 0.0
    %279 = vmatprep.subr.mxu0 0.0
    %280 = vmatpush1.msra.mxu0 0.0
    %281 = vmatprep.subr.mxu0 0.0
    %282 = vmatpush1.msra.mxu0 0.0
    %283 = vmatprep.subr.mxu0 0.0
    %284 = vmatpush1.msra.mxu0 0.0
    %285 = vmatprep.subr.mxu0 0.0
    %286 = vmatpush1.msra.mxu0 0.0
    %287 = vmatprep.subr.mxu0 0.0
    %288 = vmatpush1.msra.mxu0 0.0
    %289 = vmatprep.subr.mxu0 0.0
    %290 = vmatpush1.msra.mxu0 0.0
    %291 = vmatprep.subr.mxu0 0.0
    %292 = vmatpush1.msra.mxu0 0.0
    %293 = vmatprep.subr.mxu0 0.0
    %294 = vmatpush1.msra.mxu0 0.0
    %295 = vmatprep.subr.mxu0 0.0
    %296 = vmatpush1.msra.mxu0 0.0
    %297 = vmatprep.subr.mxu0 0.0
    %298 = vmatpush1.msra.mxu0 0.0
    %299 = vmatprep.subr.mxu0 0.0
    %300 = vmatpush1.msra.mxu0 0.0
    %301 = vmatprep.subr.mxu0 0.0
    %302 = vmatpush1.msra.mxu0 0.0
    %303 = vmatprep.subr.mxu0 0.0
    %304 = vmatpush1.msra.mxu0 0.0
    %305 = vmatprep.subr.mxu0 0.0
    %306 = vmatpush1.msra.mxu0 0.0
    %307 = vmatprep.subr.mxu0 0.0
    %308 = vmatpush1.msra.mxu0 0.0
    %309 = vmatprep.subr.mxu0 0.0
    %310 = vmatpush1.msra.mxu0 0.0
    %311 = vmatprep.mubr.f32.mxu0 0.0
    %312 = vmatmul.mubr.f32.gmra.mrb[0].mxu0 %v239
    %v313 = vpop.f32.mrb[0].mxu0
    %v314 = vadd.f32 %v233, %v313
    %v315 = vpop.f32.mrb[0].mxu0
    %v316 = vadd.f32 %v235, %v315
    %317 = vdwg.mxu0
    %v319 = vlaneseq
    %v320 = vshrl.u32 %v319, 7
    %v321 = vsub.s32 0, %v320
    %v322 = vrot.slane %v53, %v321
    %v323 = vlaneseq
    %v324 = vshrl.u32 %v323, 7
    %v325 = vsub.s32 4, %v324
    %v326 = vrot.slane %v53, %v325
    %v329 = vlaneseq
    %v330 = vshrl.u32 %v329, 7
    %v331 = vsub.s32 0, %v330
    %v332 = vrot.slane %v322, %v331
    %v333 = vlaneseq
    %v334 = vshrl.u32 %v333, 7
    %v335 = vsub.s32 0, %v334
    %v336 = vrot.slane %v326, %v335
    %v337 = vadd.f32 %v314, %v332
    %v338 = vadd.f32 %v316, %v336
    %v339 = vmax.f32 %v337, 0.0
    %v340 = vmax.f32 %v338, 0.0
    %v341 = vlaneseq
    %v342 = vshrl.u32 %v341, 7
    %v343 = vsub.s32 1, %v342
    %v344 = vrot.slane %v53, %v343
    %v345 = vlaneseq
    %v346 = vshrl.u32 %v345, 7
    %v347 = vsub.s32 5, %v346
    %v348 = vrot.slane %v53, %v347
    %v351 = vlaneseq
    %v352 = vshrl.u32 %v351, 7
    %v353 = vsub.s32 1, %v352
    %v354 = vrot.slane %v344, %v353
    %v355 = vlaneseq
    %v356 = vshrl.u32 %v355, 7
    %v357 = vsub.s32 1, %v356
    %v358 = vrot.slane %v348, %v357
    %359 = vmatprep.subr.mxu0 %v60
    %360 = vmatpush1.msra.mxu0 %v59
    %361 = vmatprep.subr.mxu0 %v62
    %362 = vmatpush1.msra.mxu0 %v61
    %363 = vmatprep.subr.mxu0 %v64
    %364 = vmatpush1.msra.mxu0 %v63
    %365 = vmatprep.subr.mxu0 %v66
    %366 = vmatpush1.msra.mxu0 %v65
    %367 = vmatprep.subr.mxu0 %v68
    %368 = vmatpush1.msra.mxu0 %v67
    %369 = vmatprep.subr.mxu0 %v70
    %370 = vmatpush1.msra.mxu0 %v69
    %371 = vmatprep.subr.mxu0 %v72
    %372 = vmatpush1.msra.mxu0 %v71
    %373 = vmatprep.subr.mxu0 %v74
    %374 = vmatpush1.msra.mxu0 %v73
    %375 = vmatprep.subr.mxu0 %v76
    %376 = vmatpush1.msra.mxu0 %v75
    %377 = vmatprep.subr.mxu0 %v78
    %378 = vmatpush1.msra.mxu0 %v77
    %379 = vmatprep.subr.mxu0 %v80
    %380 = vmatpush1.msra.mxu0 %v79
    %381 = vmatprep.subr.mxu0 %v82
    %382 = vmatpush1.msra.mxu0 %v81
    %383 = vmatprep.subr.mxu0 %v84
    %384 = vmatpush1.msra.mxu0 %v83
    %385 = vmatprep.subr.mxu0 %v86
    %386 = vmatpush1.msra.mxu0 %v85
    %387 = vmatprep.subr.mxu0 %v88
    %388 = vmatpush1.msra.mxu0 %v87
    %389 = vmatprep.subr.mxu0 %v90
    %390 = vmatpush1.msra.mxu0 %v89
    %391 = vmatprep.subr.mxu0 %v92
    %392 = vmatpush1.msra.mxu0 %v91
    %393 = vmatprep.subr.mxu0 %v94
    %394 = vmatpush1.msra.mxu0 %v93
    %395 = vmatprep.subr.mxu0 %v96
    %396 = vmatpush1.msra.mxu0 %v95
    %397 = vmatprep.subr.mxu0 %v98
    %398 = vmatpush1.msra.mxu0 %v97
    %399 = vmatprep.subr.mxu0 %v100
    %400 = vmatpush1.msra.mxu0 %v99
    %401 = vmatprep.subr.mxu0 %v102
    %402 = vmatpush1.msra.mxu0 %v101
    %403 = vmatprep.subr.mxu0 %v104
    %404 = vmatpush1.msra.mxu0 %v103
    %405 = vmatprep.subr.mxu0 %v106
    %406 = vmatpush1.msra.mxu0 %v105
    %407 = vmatprep.subr.mxu0 %v108
    %408 = vmatpush1.msra.mxu0 %v107
    %409 = vmatprep.subr.mxu0 %v110
    %410 = vmatpush1.msra.mxu0 %v109
    %411 = vmatprep.subr.mxu0 %v112
    %412 = vmatpush1.msra.mxu0 %v111
    %413 = vmatprep.subr.mxu0 %v114
    %414 = vmatpush1.msra.mxu0 %v113
    %415 = vmatprep.subr.mxu0 %v116
    %416 = vmatpush1.msra.mxu0 %v115
    %417 = vmatprep.subr.mxu0 %v118
    %418 = vmatpush1.msra.mxu0 %v117
    %419 = vmatprep.subr.mxu0 %v120
    %420 = vmatpush1.msra.mxu0 %v119
    %421 = vmatprep.subr.mxu0 %v122
    %422 = vmatpush1.msra.mxu0 %v121
    %423 = vmatprep.mubr.f32.mxu0 %v340
    %424 = vmatmul.mubr.f32.gmra.mrb[0].mxu0 %v339
    %v425 = vpop.f32.mrb[0].mxu0
    %v426 = vadd.f32 %v354, %v425
    %v427 = vpop.f32.mrb[0].mxu0
    %v428 = vadd.f32 %v358, %v427
    %429 = vdwg.mxu0
    %v430 = vmax.f32 %v426, 0.0
    %v431 = vmax.f32 %v428, 0.0
    %v432 = vlaneseq
    %v433 = vshrl.u32 %v432, 7
    %v434 = vsub.s32 2, %v433
    %v435 = vrot.slane %v53, %v434
    %436 = vmatprep.subr.mxu0 0.0
    %437 = vmatpush1.msra.mxu0 %v123
    %438 = vmatprep.subr.mxu0 0.0
    %439 = vmatpush1.msra.mxu0 %v124
    %440 = vmatprep.subr.mxu0 0.0
    %441 = vmatpush1.msra.mxu0 %v125
    %442 = vmatprep.subr.mxu0 0.0
    %443 = vmatpush1.msra.mxu0 %v126
    %444 = vmatprep.subr.mxu0 0.0
    %445 = vmatpush1.msra.mxu0 %v127
    %446 = vmatprep.subr.mxu0 0.0
    %447 = vmatpush1.msra.mxu0 %v128
    %448 = vmatprep.subr.mxu0 0.0
    %449 = vmatpush1.msra.mxu0 %v129
    %450 = vmatprep.subr.mxu0 0.0
    %451 = vmatpush1.msra.mxu0 %v130
    %452 = vmatprep.subr.mxu0 0.0
    %453 = vmatpush1.msra.mxu0 %v131
    %454 = vmatprep.subr.mxu0 0.0
    %455 = vmatpush1.msra.mxu0 %v132
    %456 = vmatprep.subr.mxu0 0.0
    %457 = vmatpush1.msra.mxu0 %v133
    %458 = vmatprep.subr.mxu0 0.0
    %459 = vmatpush1.msra.mxu0 %v134
    %460 = vmatprep.subr.mxu0 0.0
    %461 = vmatpush1.msra.mxu0 %v135
    %462 = vmatprep.subr.mxu0 0.0
    %463 = vmatpush1.msra.mxu0 %v136
    %464 = vmatprep.subr.mxu0 0.0
    %465 = vmatpush1.msra.mxu0 %v137
    %466 = vmatprep.subr.mxu0 0.0
    %467 = vmatpush1.msra.mxu0 %v138
    %468 = vmatprep.subr.mxu0 0.0
    %469 = vmatpush1.msra.mxu0 %v139
    %470 = vmatprep.subr.mxu0 0.0
    %471 = vmatpush1.msra.mxu0 %v140
    %472 = vmatprep.subr.mxu0 0.0
    %473 = vmatpush1.msra.mxu0 %v141
    %474 = vmatprep.subr.mxu0 0.0
    %475 = vmatpush1.msra.mxu0 %v142
    %476 = vmatprep.subr.mxu0 0.0
    %477 = vmatpush1.msra.mxu0 %v143
    %478 = vmatprep.subr.mxu0 0.0
    %479 = vmatpush1.msra.mxu0 %v144
    %480 = vmatprep.subr.mxu0 0.0
    %481 = vmatpush1.msra.mxu0 %v145
    %482 = vmatprep.subr.mxu0 0.0
    %483 = vmatpush1.msra.mxu0 %v146
    %484 = vmatprep.subr.mxu0 0.0
    %485 = vmatpush1.msra.mxu0 %v147
    %486 = vmatprep.subr.mxu0 0.0
    %487 = vmatpush1.msra.mxu0 %v148
    %488 = vmatprep.subr.mxu0 0.0
    %489 = vmatpush1.msra.mxu0 %v149
    %490 = vmatprep.subr.mxu0 0.0
    %491 = vmatpush1.msra.mxu0 %v150
    %492 = vmatprep.subr.mxu0 0.0
    %493 = vmatpush1.msra.mxu0 %v151
    %494 = vmatprep.subr.mxu0 0.0
    %495 = vmatpush1.msra.mxu0 %v152
    %496 = vmatprep.subr.mxu0 0.0
    %497 = vmatpush1.msra.mxu0 %v153
    %498 = vmatprep.subr.mxu0 0.0
    %499 = vmatpush1.msra.mxu0 %v154
    %500 = vmatprep.mubr.f32.mxu0 %v431
    %501 = vmatmul.mubr.f32.gmra.mrb[0].mxu0 %v430
    %v502 = vpop.f32.mrb[0].mxu0
    %v503 = vadd.f32 %v435, %v502
    %v504 = vpop.f32.mrb[0].mxu0
    %505 = vdwg.mxu0
    %506 = vst [vmem:[%s6] sm:$0xff] %v503
    // Predicated region
    $region34: #{twin_critic_forward.1} parent=1 // pred_check
      _
    $region35: #{twin_critic_forward.1} parent=1 // pred_check_branch
      %508 = sbr.rel (0) target = $region37
    $region36: #{twin_critic_forward.1} parent=1 // pred_region
      _
    $region37: #{twin_critic_forward.1} parent=1 // pred_fallthru
      _
    // Predicated region
    $region38: #{twin_critic_forward.1} parent=1 // pred_check
      _
    $region39: #{twin_critic_forward.1} parent=1 // pred_check_branch
      %510 = sbr.rel (0) target = $region41
    $region40: #{twin_critic_forward.1} parent=1 // pred_region
      _
    $region41: #{twin_critic_forward.1} parent=1 // pred_fallthru
      _
    %511 = vsyncpa [#allocation3], 1
    %512 = vsyncpa [#allocation5], 1

</llo_original>
